<compile_context>
chip_gen: v6e
topology: v6e:2x2x1
jax: 0.10.0
libtpu: 0.0.40
codegen_flags: <defaults>
</compile_context>

<pallas_src>
import functools

import jax
import jax.numpy as jnp
from jax import lax
from jax.experimental import pallas as pl
from jax.experimental.pallas import tpu as pltpu


_VMEM_LIMIT_BYTES = 32 * 1024 * 1024  # safe raised scoped-VMEM limit on v5e/v6e/v7x


def _block_budget_bytes():
    """Generation-aware cap for one (bt, C, ts) input block (double-buffered)."""
    try:
        vmem = pltpu.get_tpu_info().vmem_capacity_bytes
        if vmem >= 96 * 1024 * 1024:          # v5e / v6e: 128 MiB physical VMEM
            return 12 * 1024 * 1024
        return 8 * 1024 * 1024                # v7x: 64 MiB physical VMEM
    except Exception:
        return 8 * 1024 * 1024


def _pick_tiling(B, C, S, elem_bytes, budget):
    """Pick (bt, ts, n_spatial):
      * ts: lane-axis tile, multiple of 128 (ragged tail masked in-kernel) or
        the full extent S when it fits in one block.
      * bt: batch packing; divisor of B, kept a multiple of 8 (or == B, == 1)
        so the (bt, C) output block stays layout-legal.
    """
    row_bytes = max(C * elem_bytes, 1)
    max_ts = max(128, (budget // row_bytes) // 128 * 128)
    if S <= max_ts:
        ts, n_s = S, 1                        # single full-extent spatial block
    else:
        ts, n_s = max_ts, -(-S // max_ts)     # ragged tail masked in-kernel

    block_bytes = C * ts * elem_bytes
    bt = 1
    for cand in range(B, 0, -1):
        if B % cand:
            continue
        if cand != B and cand != 1 and cand % 8:
            continue
        if cand * block_bytes <= budget:
            bt = cand
            break
    return bt, ts, n_s


def _channel_gate_kernel(x_ref, w1_ref, b1_ref, w2_ref, b2_ref, gate_ref,
                         acc_ref, *, inv_area, W, Hk, S, ts, need_mask):
    """Grid = (B//bt, n_spatial). x block: (bt, C, ts); gate block: (bt, C)."""
    s = pl.program_id(1)

    @pl.when(s == 0)
    def _init():
        acc_ref[...] = jnp.zeros_like(acc_ref)

    x = x_ref[...].astype(jnp.float32)                       # (bt, C, ts)
    if need_mask:
        # Mask (a) columns >= H (W != H: pool window is the leading HxH) and
        # (b) the ragged spatial tail of the last block.
        lane = lax.broadcasted_iota(jnp.int32, x.shape, dimension=2)
        gidx = s * ts + lane                                  # flat h*W + w index
        valid = (gidx < S) & ((gidx % W) < Hk)
        x = jnp.where(valid, x, 0.0)
    acc_ref[...] += jnp.sum(x, axis=-1)                       # (bt, C)

    @pl.when(s == pl.num_programs(1) - 1)
    def _finalize():
        avg = acc_ref[...] * inv_area                         # (bt, C)
        # Linear(C, hid) with BatchNorm1d (eval) pre-folded into w1/b1, + ReLU.
        h = jnp.dot(avg, w1_ref[...],
                    preferred_element_type=jnp.float32) + b1_ref[...]
        h = jnp.maximum(h, 0.0)
        # Linear(hid, C)
        g = jnp.dot(h, w2_ref[...],
                    preferred_element_type=jnp.float32) + b2_ref[...]
        gate_ref[...] = g.astype(gate_ref.dtype)


def channel_gate(x, w1, b1, gamma, beta, run_mean, run_var, w2, b2,
                 eps=1e-5, block_budget_bytes=None):
    """x: (B, C, H, W). Returns the gate expanded to x.shape (module semantics).

    BatchNorm1d is applied in eval mode with the provided running statistics.
    """
    B, C, H, W = x.shape
    # avg_pool2d(x, H, stride=H) + Flatten + Linear(C, .) only type-checks in
    # PyTorch when there is exactly one HxH pooling window per image.
    assert H <= W < 2 * H, f"unsupported aspect ratio H={H}, W={W}"

    S = H * W
    x3 = x.reshape(B, C, S)        # lane-dense spatial axis last; no extra HBM copy

    # Fold BatchNorm1d (eval) into the first Linear: y = (x@W1^T + b1 - m)*s + beta
    scale = (gamma * lax.rsqrt(run_var.astype(jnp.float32) + eps)).astype(jnp.float32)
    w1f = w1.T.astype(jnp.float32) * scale[None, :]                   # (C, hid)
    b1f = ((b1 - run_mean) * scale + beta).reshape(1, -1).astype(jnp.float32)
    w2t = w2.T.astype(jnp.float32)                                    # (hid, C)
    b2f = b2.reshape(1, -1).astype(jnp.float32)
    hid = w1.shape[0]

    budget = (block_budget_bytes if block_budget_bytes is not None
              else _block_budget_bytes())
    bt, ts, n_s = _pick_tiling(B, C, S, x.dtype.itemsize, budget)
    need_mask = (W != H) or (S % ts != 0)

    kernel = functools.partial(
        _channel_gate_kernel, inv_area=1.0 / float(H * H),
        W=W, Hk=H, S=S, ts=ts, need_mask=need_mask)

    cost = pl.CostEstimate(
        flops=B * C * S + 2 * B * C * hid * 2,
        transcendentals=0,
        bytes_accessed=B * C * S * x.dtype.itemsize + B * C * 4)

    gate = pl.pallas_call(
        kernel,
        out_shape=jax.ShapeDtypeStruct((B, C), jnp.float32),
        grid_spec=pltpu.PrefetchScalarGridSpec(
            num_scalar_prefetch=0,
            grid=(B // bt, n_s),
            in_specs=[
                pl.BlockSpec((bt, C, ts), lambda b, s: (b, 0, s)),   # x chunk
                pl.BlockSpec((C, hid), lambda b, s: (0, 0)),         # w1 (BN-folded)
                pl.BlockSpec((1, hid), lambda b, s: (0, 0)),         # b1 (BN-folded)
                pl.BlockSpec((hid, C), lambda b, s: (0, 0)),         # w2
                pl.BlockSpec((1, C), lambda b, s: (0, 0)),           # b2
            ],
            out_specs=pl.BlockSpec((bt, C), lambda b, s: (b, 0)),
            scratch_shapes=[pltpu.VMEM((bt, C), jnp.float32)],       # running sum
        ),
        compiler_params=pltpu.CompilerParams(
            dimension_semantics=("parallel", "arbitrary"),
            vmem_limit_bytes=_VMEM_LIMIT_BYTES),
        cost_estimate=cost,
    )(x3, w1f, b1f, w2t, b2f)

    # unsqueeze(2).unsqueeze(3).expand_as(x): zero-FLOP broadcast, left to XLA.
    return jnp.broadcast_to(gate[:, :, None, None], (B, C, H, W)).astype(x.dtype)


def channel_gate_ref(x, w1, b1, gamma, beta, run_mean, run_var, w2, b2, eps=1e-5):
    """Pure-JAX reference mirroring the PyTorch module (BN in eval mode)."""
    B, C, H, W = x.shape
    avg = jnp.mean(x[:, :, :H, :H], axis=(2, 3))
    h = avg @ w1.T + b1
    h = (h - run_mean) / jnp.sqrt(run_var + eps) * gamma + beta
    h = jnp.maximum(h, 0.0)
    gate = h @ w2.T + b2
    return jnp.broadcast_to(gate[:, :, None, None], (B, C, H, W))


if __name__ == "__main__":
    # Shapes consistent with the module: gate_channel=64, reduction_ratio=16.
    B, C, H, W = 2, 64, 16, 16
    hid = C // 16  # = 4

    key = jax.random.PRNGKey(0)
    kx, k1, k2, k3, k4, k5, k6, k7, k8 = jax.random.split(key, 9)

    x = jax.random.normal(kx, (B, C, H, W), jnp.float32)

    # Deterministic synthetic parameters (Linear weights / biases, BN stats).
    w1 = 0.1 * jax.random.normal(k1, (hid, C), jnp.float32)
    b1 = 0.1 * jax.random.normal(k2, (hid,), jnp.float32)
    gamma = 1.0 + 0.1 * jax.random.normal(k3, (hid,), jnp.float32)
    beta = 0.1 * jax.random.normal(k4, (hid,), jnp.float32)
    run_mean = 0.05 * jax.random.normal(k5, (hid,), jnp.float32)
    run_var = 1.0 + 0.1 * jnp.abs(jax.random.normal(k6, (hid,), jnp.float32))
    w2 = 0.1 * jax.random.normal(k7, (C, hid), jnp.float32)
    b2 = 0.1 * jax.random.normal(k8, (C,), jnp.float32)

    # Default path: batch-packed single-block streaming (grid (1, 1) here).
    ref = channel_gate_ref(x, w1, b1, gamma, beta, run_mean, run_var, w2, b2)
    out = jax.jit(channel_gate)(x, w1, b1, gamma, beta, run_mean, run_var, w2, b2)
    out = jax.block_until_ready(out)
    assert out.shape == (B, C, H, W)
    assert jnp.allclose(out, ref, atol=1e-4, rtol=1e-4), "mismatch vs reference"

    # Masked / multi-step path: W != H (pool window = leading HxH) plus a
    # forced-small block budget so the spatial axis tiles with a ragged tail.
    W2 = 20
    x2 = jax.random.normal(kx, (B, C, H, W2), jnp.float32)
    ref2 = channel_gate_ref(x2, w1, b1, gamma, beta, run_mean, run_var, w2, b2)
    out2 = jax.jit(functools.partial(channel_gate, block_budget_bytes=64 * 1024))(
        x2, w1, b1, gamma, beta, run_mean, run_var, w2, b2)
    out2 = jax.block_until_ready(out2)
    assert out2.shape == (B, C, H, W2)
    assert jnp.allclose(out2, ref2, atol=1e-4, rtol=1e-4), "mismatch (masked path)"

    print("KERNEL_OK")
</pallas_src>

<mosaic_0001>
module attributes {stable_mosaic.version = 11 : i64} {
  func.func @_channel_gate_kernel(%arg0: i32, %arg1: i32, %arg2: memref<2x64x256xf32, #tpu.memory_space<vmem>>, %arg3: memref<64x4xf32, #tpu.memory_space<vmem>>, %arg4: memref<1x4xf32, #tpu.memory_space<vmem>>, %arg5: memref<4x64xf32, #tpu.memory_space<vmem>>, %arg6: memref<1x64xf32, #tpu.memory_space<vmem>>, %arg7: memref<2x64xf32, #tpu.memory_space<vmem>>, %arg8: memref<2x64xf32, #tpu.memory_space<vmem>>) attributes {dimension_semantics = [#tpu.dimension_semantics<parallel>, #tpu.dimension_semantics<arbitrary>], iteration_bounds = array<i64: 1, 1>, scalar_prefetch = 0 : i64, scratch_operands = 1 : i64, tpu.core_type = #tpu.core_type<tc>, window_params = [{transform_indices = @transform_0, window_bounds = array<i64: 2, 64, 256>}, {pipeline_mode = #tpu.pipeline_mode<synchronous>, transform_indices = @transform_1, window_bounds = array<i64: 64, 4>}, {pipeline_mode = #tpu.pipeline_mode<synchronous>, transform_indices = @transform_2, window_bounds = array<i64: 1, 4>}, {pipeline_mode = #tpu.pipeline_mode<synchronous>, transform_indices = @transform_3, window_bounds = array<i64: 4, 64>}, {pipeline_mode = #tpu.pipeline_mode<synchronous>, transform_indices = @transform_4, window_bounds = array<i64: 1, 64>}, {transform_indices = @transform_5, window_bounds = array<i64: 2, 64>}]} {
    %c0_i32 = arith.constant 0 : i32
    %0 = arith.cmpi eq, %arg1, %c0_i32 : i32
    %1 = arith.extui %0 : i1 to i32
    %c0_i32_0 = arith.constant 0 : i32
    %2 = arith.cmpi ne, %1, %c0_i32_0 : i32
    scf.if %2 {
      %cst_9 = arith.constant 0.000000e+00 : f32
      %11 = vector.broadcast %cst_9 : f32 to vector<2x64xf32>
      %c0_10 = arith.constant 0 : index
      %c0_11 = arith.constant 0 : index
      %12 = vector.load %arg8[%c0_10, %c0_11] : memref<2x64xf32, #tpu.memory_space<vmem>>, vector<2x64xf32>
      tpu.vector_store %arg8[%c0_10, %c0_11], %11 {strides = array<i32>} : memref<2x64xf32, #tpu.memory_space<vmem>>, vector<2x64xf32>,
    } else {
    }
    %c0 = arith.constant 0 : index
    %c0_1 = arith.constant 0 : index
    %c0_2 = arith.constant 0 : index
    %3 = vector.load %arg2[%c0, %c0_1, %c0_2] : memref<2x64x256xf32, #tpu.memory_space<vmem>>, vector<2x64x256xf32>
    %c0_3 = arith.constant 0 : index
    %c0_4 = arith.constant 0 : index
    %4 = vector.load %arg8[%c0_3, %c0_4] : memref<2x64xf32, #tpu.memory_space<vmem>>, vector<2x64xf32>
    %cst = arith.constant dense<0.000000e+00> : vector<2x64xf32>
    %5 = vector.multi_reduction <add>, %3, %cst [2] : vector<2x64x256xf32> to vector<2x64xf32>
    %6 = arith.addf %4, %5 : vector<2x64xf32>
    %c0_5 = arith.constant 0 : index
    %c0_6 = arith.constant 0 : index
    %7 = vector.load %arg8[%c0_5, %c0_6] : memref<2x64xf32, #tpu.memory_space<vmem>>, vector<2x64xf32>
    tpu.vector_store %arg8[%c0_5, %c0_6], %6 {strides = array<i32>} : memref<2x64xf32, #tpu.memory_space<vmem>>, vector<2x64xf32>,
    %c0_i32_7 = arith.constant 0 : i32
    %8 = arith.cmpi eq, %arg1, %c0_i32_7 : i32
    %9 = arith.extui %8 : i1 to i32
    %c0_i32_8 = arith.constant 0 : i32
    %10 = arith.cmpi ne, %9, %c0_i32_8 : i32
    scf.if %10 {
      %c0_9 = arith.constant 0 : index
      %c0_10 = arith.constant 0 : index
      %11 = vector.load %arg8[%c0_9, %c0_10] : memref<2x64xf32, #tpu.memory_space<vmem>>, vector<2x64xf32>
      %cst_11 = arith.constant 3.906250e-03 : f32
      %12 = vector.broadcast %cst_11 : f32 to vector<2x64xf32>
      %13 = arith.mulf %11, %12 : vector<2x64xf32>
      %c0_12 = arith.constant 0 : index
      %c0_13 = arith.constant 0 : index
      %14 = vector.load %arg3[%c0_12, %c0_13] : memref<64x4xf32, #tpu.memory_space<vmem>>, vector<64x4xf32>
      %cst_14 = arith.constant dense<0.000000e+00> : vector<2x4xf32>
      %15 = tpu.matmul %13, %14, %cst_14 {dimension_numbers = #tpu.dot_dimension_numbers<[1], [0], [0], [1], [0, 0, 1, 1], [], []>} : vector<2x64xf32>, vector<64x4xf32>, vector<2x4xf32> -> vector<2x4xf32>
      %c0_15 = arith.constant 0 : index
      %c0_16 = arith.constant 0 : index
      %16 = vector.load %arg4[%c0_15, %c0_16] : memref<1x4xf32, #tpu.memory_space<vmem>>, vector<1x4xf32>
      %17 = vector.broadcast %16 : vector<1x4xf32> to vector<2x4xf32>
      %18 = arith.addf %15, %17 : vector<2x4xf32>
      %cst_17 = arith.constant 0.000000e+00 : f32
      %19 = vector.broadcast %cst_17 : f32 to vector<2x4xf32>
      %20 = arith.maximumf %18, %19 : vector<2x4xf32>
      %c0_18 = arith.constant 0 : index
      %c0_19 = arith.constant 0 : index
      %21 = vector.load %arg5[%c0_18, %c0_19] : memref<4x64xf32, #tpu.memory_space<vmem>>, vector<4x64xf32>
      %cst_20 = arith.constant dense<0.000000e+00> : vector<2x64xf32>
      %22 = tpu.matmul %20, %21, %cst_20 {dimension_numbers = #tpu.dot_dimension_numbers<[1], [0], [0], [1], [0, 0, 1, 1], [], []>} : vector<2x4xf32>, vector<4x64xf32>, vector<2x64xf32> -> vector<2x64xf32>
      %c0_21 = arith.constant 0 : index
      %c0_22 = arith.constant 0 : index
      %23 = vector.load %arg6[%c0_21, %c0_22] : memref<1x64xf32, #tpu.memory_space<vmem>>, vector<1x64xf32>
      %24 = vector.broadcast %23 : vector<1x64xf32> to vector<2x64xf32>
      %25 = arith.addf %22, %24 : vector<2x64xf32>
      %c0_23 = arith.constant 0 : index
      %c0_24 = arith.constant 0 : index
      %26 = vector.load %arg7[%c0_23, %c0_24] : memref<2x64xf32, #tpu.memory_space<vmem>>, vector<2x64xf32>
      tpu.vector_store %arg7[%c0_23, %c0_24], %25 {strides = array<i32>} : memref<2x64xf32, #tpu.memory_space<vmem>>, vector<2x64xf32>,
    } else {
    }
    return
  }
  func.func @transform_0(%arg0: i32, %arg1: i32) -> (i32, i32, i32) {
    %c0_i32 = arith.constant 0 : i32
    %c0_i32_0 = arith.constant 0 : i32
    return %arg0, %c0_i32, %arg1 : i32, i32, i32
  }
  func.func @transform_1(%arg0: i32, %arg1: i32) -> (i32, i32) {
    %c0_i32 = arith.constant 0 : i32
    %c0_i32_0 = arith.constant 0 : i32
    %c0_i32_1 = arith.constant 0 : i32
    return %c0_i32, %c0_i32_0 : i32, i32
  }
  func.func @transform_2(%arg0: i32, %arg1: i32) -> (i32, i32) {
    %c0_i32 = arith.constant 0 : i32
    %c0_i32_0 = arith.constant 0 : i32
    %c0_i32_1 = arith.constant 0 : i32
    return %c0_i32, %c0_i32_0 : i32, i32
  }
  func.func @transform_3(%arg0: i32, %arg1: i32) -> (i32, i32) {
    %c0_i32 = arith.constant 0 : i32
    %c0_i32_0 = arith.constant 0 : i32
    %c0_i32_1 = arith.constant 0 : i32
    return %c0_i32, %c0_i32_0 : i32, i32
  }
  func.func @transform_4(%arg0: i32, %arg1: i32) -> (i32, i32) {
    %c0_i32 = arith.constant 0 : i32
    %c0_i32_0 = arith.constant 0 : i32
    %c0_i32_1 = arith.constant 0 : i32
    return %c0_i32, %c0_i32_0 : i32, i32
  }
  func.func @transform_5(%arg0: i32, %arg1: i32) -> (i32, i32) {
    %c0_i32 = arith.constant 0 : i32
    %c0_i32_0 = arith.constant 0 : i32
    return %arg0, %c0_i32 : i32, i32
  }
}

</mosaic_0001>

<llo_original>
// kernel: channel_gate.1
$region0: #{channel_gate.1}
  #allocation0 [shape = 'u32[]', space=smem, size = 0x4, offset = 0x4, fixed_abs, tag = 'smem constant byte address 0x4 - core index']
  #allocation1 [shape = 'u32[144,128]{1,0:T(1,128)}', space=vmem, size = 0x12000, scoped, tag = 'internal scratch']
  #allocation2 [shape = 'f32[2,64]{1,0:T(2,128)}', space=vmem, size = 0x400, scoped, tag = 'scratch operand']
  %s0 = inlined_call_operand.vmem [shape: f32[2,64,256], index: 0, kind: input, shape index: {}]
  %s1 = inlined_call_operand.vmem [shape: f32[64,4], index: 1, kind: input, shape index: {}]
  %s2 = inlined_call_operand.vmem [shape: f32[1,4], index: 2, kind: input, shape index: {}]
  %s3 = inlined_call_operand.vmem [shape: f32[4,64], index: 3, kind: input, shape index: {}]
  %s4 = inlined_call_operand.vmem [shape: f32[1,64], index: 4, kind: input, shape index: {}]
  %s5 = inlined_call_operand.vmem [shape: f32[2,64], index: 5, kind: output, shape index: {}]
  %s6 = sld [smem:[#allocation0]]
  $region38: #{channel_gate.1} parent=0
    _
  %s8 = ssub.s32 1, %s6
  %s9 = scalar_select 0, %s8, %s6
  // Predicated region
  $region2: #{channel_gate.1} parent=0 // pred_check
    _
  $region3: #{channel_gate.1} parent=0 // pred_check_branch
    %11 = sbr.rel (0) target = $region5
  $region4: #{channel_gate.1} parent=0 // pred_region
    _
  $region5: #{channel_gate.1} parent=0 // pred_fallthru
    _
  // Predicated region
  $region6: #{channel_gate.1} parent=0 // pred_check
    _
  $region7: #{channel_gate.1} parent=0 // pred_check_branch
    %13 = sbr.rel (0) target = $region9
  $region8: #{channel_gate.1} parent=0 // pred_region
    _
  $region9: #{channel_gate.1} parent=0 // pred_fallthru
    _
  // Predicated region
  $region10: #{channel_gate.1} parent=0 // pred_check
    _
  $region11: #{channel_gate.1} parent=0 // pred_check_branch
    %15 = sbr.rel (0) target = $region13
  $region12: #{channel_gate.1} parent=0 // pred_region
    _
  $region13: #{channel_gate.1} parent=0 // pred_fallthru
    _
  // Predicated region
  $region14: #{channel_gate.1} parent=0 // pred_check
    _
  $region15: #{channel_gate.1} parent=0 // pred_check_branch
    %17 = sbr.rel (0) target = $region17
  $region16: #{channel_gate.1} parent=0 // pred_region
    _
  $region17: #{channel_gate.1} parent=0 // pred_fallthru
    _
  // Predicated region
  $region18: #{channel_gate.1} parent=0 // pred_check
    _
  $region19: #{channel_gate.1} parent=0 // pred_check_branch
    %19 = sbr.rel (0) target = $region21
  $region20: #{channel_gate.1} parent=0 // pred_region
    _
  $region21: #{channel_gate.1} parent=0 // pred_fallthru
    _
  %p20 = scmp.eq.s32.totalorder 0, 0
  // Predicated region
  $region22: #{channel_gate.1} parent=0 // pred_check
    %p21 = pneg %p20
  $region23: #{channel_gate.1} parent=0 // pred_check_branch
    %23 = sbr.rel (%p21) target = $region25
  $region24: #{channel_gate.1} parent=0 // pred_region
    %vm24 = vcmask 517120
    %25 = vst.msk [vmem:[#allocation2] sm:$0x3] %vm24, 0.0
  $region25: #{channel_gate.1} parent=0 // pred_fallthru
    _
  %v26 = vld [vmem:[%s0] sm:$0xff]
  %v27 = vld [vmem:[%s0 + $0x8] sm:$0xff]
  %v28 = vld [vmem:[%s0 + $0x10] sm:$0xff]
  %v29 = vld [vmem:[%s0 + $0x18] sm:$0xff]
  %v30 = vld [vmem:[%s0 + $0x20] sm:$0xff]
  %v31 = vld [vmem:[%s0 + $0x28] sm:$0xff]
  %v32 = vld [vmem:[%s0 + $0x30] sm:$0xff]
  %v33 = vld [vmem:[%s0 + $0x38] sm:$0xff]
  %v34 = vld [vmem:[%s0 + $0x40] sm:$0xff]
  %v35 = vld [vmem:[%s0 + $0x48] sm:$0xff]
  %v36 = vld [vmem:[%s0 + $0x50] sm:$0xff]
  %v37 = vld [vmem:[%s0 + $0x58] sm:$0xff]
  %v38 = vld [vmem:[%s0 + $0x60] sm:$0xff]
  %v39 = vld [vmem:[%s0 + $0x68] sm:$0xff]
  %v40 = vld [vmem:[%s0 + $0x70] sm:$0xff]
  %v41 = vld [vmem:[%s0 + $0x78] sm:$0xff]
  %v42 = vld [vmem:[%s0 + $0x80] sm:$0xff]
  %v43 = vld [vmem:[%s0 + $0x88] sm:$0xff]
  %v44 = vld [vmem:[%s0 + $0x90] sm:$0xff]
  %v45 = vld [vmem:[%s0 + $0x98] sm:$0xff]
  %v46 = vld [vmem:[%s0 + $0xa0] sm:$0xff]
  %v47 = vld [vmem:[%s0 + $0xa8] sm:$0xff]
  %v48 = vld [vmem:[%s0 + $0xb0] sm:$0xff]
  %v49 = vld [vmem:[%s0 + $0xb8] sm:$0xff]
  %v50 = vld [vmem:[%s0 + $0xc0] sm:$0xff]
  %v51 = vld [vmem:[%s0 + $0xc8] sm:$0xff]
  %v52 = vld [vmem:[%s0 + $0xd0] sm:$0xff]
  %v53 = vld [vmem:[%s0 + $0xd8] sm:$0xff]
  %v54 = vld [vmem:[%s0 + $0xe0] sm:$0xff]
  %v55 = vld [vmem:[%s0 + $0xe8] sm:$0xff]
  %v56 = vld [vmem:[%s0 + $0xf0] sm:$0xff]
  %v57 = vld [vmem:[%s0 + $0xf8] sm:$0xff]
  %v58 = vld [vmem:[#allocation2] sm:$0x3]
  %v59 = vadd.f32 %v26, %v27
  %60 = vadd.xlane.f32.xlu0 %v59
  %v61 = vpop.xlane.xlu0 %60
  %v62 = vadd.f32 %v28, %v29
  %63 = vadd.xlane.f32.xlu0 %v62
  %v64 = vpop.xlane.xlu0 %63
  %v65 = vadd.f32 %v30, %v31
  %66 = vadd.xlane.f32.xlu0 %v65
  %v67 = vpop.xlane.xlu0 %66
  %v68 = vadd.f32 %v32, %v33
  %69 = vadd.xlane.f32.xlu0 %v68
  %v70 = vpop.xlane.xlu0 %69
  %v71 = vadd.f32 %v34, %v35
  %72 = vadd.xlane.f32.xlu0 %v71
  %v73 = vpop.xlane.xlu0 %72
  %v74 = vadd.f32 %v36, %v37
  %75 = vadd.xlane.f32.xlu0 %v74
  %v76 = vpop.xlane.xlu0 %75
  %v77 = vadd.f32 %v38, %v39
  %78 = vadd.xlane.f32.xlu0 %v77
  %v79 = vpop.xlane.xlu0 %78
  %v80 = vadd.f32 %v40, %v41
  %81 = vadd.xlane.f32.xlu0 %v80
  %v82 = vpop.xlane.xlu0 %81
  %v83 = vadd.f32 %v42, %v43
  %84 = vadd.xlane.f32.xlu0 %v83
  %v85 = vpop.xlane.xlu0 %84
  %v86 = vadd.f32 %v44, %v45
  %87 = vadd.xlane.f32.xlu0 %v86
  %v88 = vpop.xlane.xlu0 %87
  %v89 = vadd.f32 %v46, %v47
  %90 = vadd.xlane.f32.xlu0 %v89
  %v91 = vpop.xlane.xlu0 %90
  %v92 = vadd.f32 %v48, %v49
  %93 = vadd.xlane.f32.xlu0 %v92
  %v94 = vpop.xlane.xlu0 %93
  %v95 = vadd.f32 %v50, %v51
  %96 = vadd.xlane.f32.xlu0 %v95
  %v97 = vpop.xlane.xlu0 %96
  %v98 = vadd.f32 %v52, %v53
  %99 = vadd.xlane.f32.xlu0 %v98
  %v100 = vpop.xlane.xlu0 %99
  %v101 = vadd.f32 %v54, %v55
  %102 = vadd.xlane.f32.xlu0 %v101
  %v103 = vpop.xlane.xlu0 %102
  %v104 = vadd.f32 %v56, %v57
  %105 = vadd.xlane.f32.xlu0 %v104
  %v106 = vpop.xlane.xlu0 %105
  %v123 = vlaneseq
  %v124 = vand.u32 %v123, 127
  %v125 = vlaneseq
  %v126 = vshrl.u32 %v125, 7
  %v127 = vsub.s32 %v124, %v126
  %v128 = vrot.slane %v61, %v127
  %v129 = vadd.s32 %v124, 4294967288
  %v130 = vlaneseq
  %v131 = vshrl.u32 %v130, 7
  %v132 = vsub.s32 %v129, %v131
  %v133 = vrot.slane %v64, %v132
  %vm134 = vcmask 130112
  %v135 = vsel %vm134, %v133, %v128
  %v136 = vadd.s32 %v124, 4294967280
  %v137 = vlaneseq
  %v138 = vshrl.u32 %v137, 7
  %v139 = vsub.s32 %v136, %v138
  %v140 = vrot.slane %v67, %v139
  %vm141 = vcmask 195712
  %v142 = vsel %vm141, %v140, %v135
  %v143 = vadd.s32 %v124, 4294967272
  %v144 = vlaneseq
  %v145 = vshrl.u32 %v144, 7
  %v146 = vsub.s32 %v143, %v145
  %v147 = vrot.slane %v70, %v146
  %vm148 = vcmask 261312
  %v149 = vsel %vm148, %v147, %v142
  %v150 = vadd.s32 %v124, 4294967264
  %v151 = vlaneseq
  %v152 = vshrl.u32 %v151, 7
  %v153 = vsub.s32 %v150, %v152
  %v154 = vrot.slane %v73, %v153
  %vm155 = vcmask 326912
  %v156 = vsel %vm155, %v154, %v149
  %v157 = vadd.s32 %v124, 4294967256
  %v158 = vlaneseq
  %v159 = vshrl.u32 %v158, 7
  %v160 = vsub.s32 %v157, %v159
  %v161 = vrot.slane %v76, %v160
  %vm162 = vcmask 392512
  %v163 = vsel %vm162, %v161, %v156
  %v164 = vadd.s32 %v124, 4294967248
  %v165 = vlaneseq
  %v166 = vshrl.u32 %v165, 7
  %v167 = vsub.s32 %v164, %v166
  %v168 = vrot.slane %v79, %v167
  %vm169 = vcmask 458112
  %v170 = vsel %vm169, %v168, %v163
  %v171 = vadd.s32 %v124, 4294967240
  %v172 = vlaneseq
  %v173 = vshrl.u32 %v172, 7
  %v174 = vsub.s32 %v171, %v173
  %v175 = vrot.slane %v82, %v174
  %vm176 = vcmask 523712
  %v177 = vsel %vm176, %v175, %v170
  %v178 = vlaneseq
  %v179 = vshrl.u32 %v178, 7
  %v180 = vsub.s32 %v124, %v179
  %v181 = vrot.slane %v85, %v180
  %v182 = vlaneseq
  %v183 = vshrl.u32 %v182, 7
  %v184 = vsub.s32 %v129, %v183
  %v185 = vrot.slane %v88, %v184
  %v186 = vsel %vm134, %v185, %v181
  %v187 = vlaneseq
  %v188 = vshrl.u32 %v187, 7
  %v189 = vsub.s32 %v136, %v188
  %v190 = vrot.slane %v91, %v189
  %v191 = vsel %vm141, %v190, %v186
  %v192 = vlaneseq
  %v193 = vshrl.u32 %v192, 7
  %v194 = vsub.s32 %v143, %v193
  %v195 = vrot.slane %v94, %v194
  %v196 = vsel %vm148, %v195, %v191
  %v197 = vlaneseq
  %v198 = vshrl.u32 %v197, 7
  %v199 = vsub.s32 %v150, %v198
  %v200 = vrot.slane %v97, %v199
  %v201 = vsel %vm155, %v200, %v196
  %v202 = vlaneseq
  %v203 = vshrl.u32 %v202, 7
  %v204 = vsub.s32 %v157, %v203
  %v205 = vrot.slane %v100, %v204
  %v206 = vsel %vm162, %v205, %v201
  %v207 = vlaneseq
  %v208 = vshrl.u32 %v207, 7
  %v209 = vsub.s32 %v164, %v208
  %v210 = vrot.slane %v103, %v209
  %v211 = vsel %vm169, %v210, %v206
  %v212 = vlaneseq
  %v213 = vshrl.u32 %v212, 7
  %v214 = vsub.s32 %v171, %v213
  %v215 = vrot.slane %v106, %v214
  %v216 = vsel %vm176, %v215, %v211
  %vm217 = vcmask 1041409
  %v218 = vsel %vm217, %v216, %v177
  %v220 = vadd.f32 %v58, %v218
  %vm221 = vcmask 517120
  %222 = vst.msk [vmem:[#allocation2] sm:$0x3] %vm221, %v220
  // Predicated region
  $region26: #{channel_gate.1} parent=0 // pred_check
    %p223 = pneg %p20
  $region27: #{channel_gate.1} parent=0 // pred_check_branch
    %225 = sbr.rel (%p223) target = $region29
  $region28: #{channel_gate.1} parent=0 // pred_region
    %v226 = vld [vmem:[#allocation2] sm:$0x3]
    %v227 = vmul.f32 %v226, 0.00390625
    %v228 = vld [vmem:[%s1] sm:$0xff]
    %v229 = vld [vmem:[%s1 + $0x8] sm:$0xff]
    %v230 = vld [vmem:[%s1 + $0x10] sm:$0xff]
    %v231 = vld [vmem:[%s1 + $0x18] sm:$0xff]
    %v232 = vld [vmem:[%s1 + $0x20] sm:$0xff]
    %v233 = vld [vmem:[%s1 + $0x28] sm:$0xff]
    %v234 = vld [vmem:[%s1 + $0x30] sm:$0xff]
    %v235 = vld [vmem:[%s1 + $0x38] sm:$0xff]
    %v236 = vld [vmem:[%s2] sm:$0x1]
    %v238 = vlaneseq
    %v239 = vshrl.u32 %v238, 7
    %v240 = vsub.s32 0, %v239
    %v241 = vrot.slane %v236, %v240
    %vm243 = vcmask 523264
    %v245 = vsel %vm243, %v227, 0
    %247 = vmatprep.subr.mxu0 0.0
    %248 = vmatpush1.msra.mxu0 0.0
    %249 = vmatprep.subr.mxu0 0.0
    %250 = vmatpush1.msra.mxu0 0.0
    %251 = vmatprep.subr.mxu0 0.0
    %252 = vmatpush1.msra.mxu0 0.0
    %253 = vmatprep.subr.mxu0 0.0
    %254 = vmatpush1.msra.mxu0 0.0
    %255 = vmatprep.subr.mxu0 0.0
    %256 = vmatpush1.msra.mxu0 0.0
    %257 = vmatprep.subr.mxu0 0.0
    %258 = vmatpush1.msra.mxu0 0.0
    %259 = vmatprep.subr.mxu0 0.0
    %260 = vmatpush1.msra.mxu0 0.0
    %261 = vmatprep.subr.mxu0 0.0
    %262 = vmatpush1.msra.mxu0 0.0
    %263 = vmatprep.subr.mxu0 0.0
    %264 = vmatpush1.msra.mxu0 %v235
    %265 = vmatprep.subr.mxu0 0.0
    %266 = vmatpush1.msra.mxu0 %v234
    %267 = vmatprep.subr.mxu0 0.0
    %268 = vmatpush1.msra.mxu0 %v233
    %269 = vmatprep.subr.mxu0 0.0
    %270 = vmatpush1.msra.mxu0 %v232
    %271 = vmatprep.subr.mxu0 0.0
    %272 = vmatpush1.msra.mxu0 %v231
    %273 = vmatprep.subr.mxu0 0.0
    %274 = vmatpush1.msra.mxu0 %v230
    %275 = vmatprep.subr.mxu0 0.0
    %276 = vmatpush1.msra.mxu0 %v229
    %277 = vmatprep.subr.mxu0 0.0
    %278 = vmatpush1.msra.mxu0 %v228
    %279 = vmatprep.subr.mxu0 0.0
    %280 = vmatpush2.msra.mxu0 0.0
    %281 = vmatprep.subr.mxu0 0.0
    %282 = vmatpush2.msra.mxu0 0.0
    %283 = vmatprep.subr.mxu0 0.0
    %284 = vmatpush2.msra.mxu0 0.0
    %285 = vmatprep.subr.mxu0 0.0
    %286 = vmatpush2.msra.mxu0 0.0
    %287 = vmatprep.subr.mxu0 0.0
    %288 = vmatpush2.msra.mxu0 0.0
    %289 = vmatprep.subr.mxu0 0.0
    %290 = vmatpush2.msra.mxu0 0.0
    %291 = vmatprep.subr.mxu0 0.0
    %292 = vmatpush2.msra.mxu0 0.0
    %293 = vmatprep.subr.mxu0 0.0
    %294 = vmatpush2.msra.mxu0 0.0
    %295 = vmatprep.subr.mxu0 0.0
    %296 = vmatpush2.msra.mxu0 0.0
    %297 = vmatprep.subr.mxu0 0.0
    %298 = vmatpush2.msra.mxu0 0.0
    %299 = vmatprep.subr.mxu0 0.0
    %300 = vmatpush2.msra.mxu0 0.0
    %301 = vmatprep.subr.mxu0 0.0
    %302 = vmatpush2.msra.mxu0 0.0
    %303 = vmatprep.subr.mxu0 0.0
    %304 = vmatpush2.msra.mxu0 0.0
    %305 = vmatprep.subr.mxu0 0.0
    %306 = vmatpush2.msra.mxu0 0.0
    %307 = vmatprep.subr.mxu0 0.0
    %308 = vmatpush2.msra.mxu0 0.0
    %309 = vmatprep.subr.mxu0 0.0
    %310 = vmatpush2.msra.mxu0 0.0
    %311 = vmatprep.mubr.f32.mxu0 0.0
    %312 = vmatmul.mubr.f32.gmra.mxu0 %v245
    %v313 = vpop.f32.mrf.mxu0
    %v314 = vadd.f32 %v241, %v313
    %v315 = vpop.f32.mrf.mxu0
    %316 = vdwg.mxu0
    %v317 = vmax.f32 %v314, 0.0
    %v318 = vld [vmem:[%s3] sm:$0xf]
    %v319 = vld [vmem:[%s4] sm:$0x1]
    %v321 = vlaneseq
    %v322 = vshrl.u32 %v321, 7
    %v323 = vsub.s32 0, %v322
    %v324 = vrot.slane %v319, %v323
    %vm326 = vcmask 31744
    %v328 = vsel %vm326, %v317, 0
    %vm330 = vcmask 1043456
    %v332 = vsel %vm330, %v318, 0
    %334 = vmatprep.subr.mxu0 0.0
    %335 = vmatpush1.msra.mxu0 0.0
    %336 = vmatprep.subr.mxu0 0.0
    %337 = vmatpush1.msra.mxu0 0.0
    %338 = vmatprep.subr.mxu0 0.0
    %339 = vmatpush1.msra.mxu0 0.0
    %340 = vmatprep.subr.mxu0 0.0
    %341 = vmatpush1.msra.mxu0 0.0
    %342 = vmatprep.subr.mxu0 0.0
    %343 = vmatpush1.msra.mxu0 0.0
    %344 = vmatprep.subr.mxu0 0.0
    %345 = vmatpush1.msra.mxu0 0.0
    %346 = vmatprep.subr.mxu0 0.0
    %347 = vmatpush1.msra.mxu0 0.0
    %348 = vmatprep.subr.mxu0 0.0
    %349 = vmatpush1.msra.mxu0 0.0
    %350 = vmatprep.subr.mxu0 0.0
    %351 = vmatpush1.msra.mxu0 0.0
    %352 = vmatprep.subr.mxu0 0.0
    %353 = vmatpush1.msra.mxu0 0.0
    %354 = vmatprep.subr.mxu0 0.0
    %355 = vmatpush1.msra.mxu0 0.0
    %356 = vmatprep.subr.mxu0 0.0
    %357 = vmatpush1.msra.mxu0 0.0
    %358 = vmatprep.subr.mxu0 0.0
    %359 = vmatpush1.msra.mxu0 0.0
    %360 = vmatprep.subr.mxu0 0.0
    %361 = vmatpush1.msra.mxu0 0.0
    %362 = vmatprep.subr.mxu0 0.0
    %363 = vmatpush1.msra.mxu0 0.0
    %364 = vmatprep.subr.mxu0 0.0
    %365 = vmatpush1.msra.mxu0 %v332
    %366 = vmatprep.subr.mxu0 0.0
    %367 = vmatpush2.msra.mxu0 0.0
    %368 = vmatprep.subr.mxu0 0.0
    %369 = vmatpush2.msra.mxu0 0.0
    %370 = vmatprep.subr.mxu0 0.0
    %371 = vmatpush2.msra.mxu0 0.0
    %372 = vmatprep.subr.mxu0 0.0
    %373 = vmatpush2.msra.mxu0 0.0
    %374 = vmatprep.subr.mxu0 0.0
    %375 = vmatpush2.msra.mxu0 0.0
    %376 = vmatprep.subr.mxu0 0.0
    %377 = vmatpush2.msra.mxu0 0.0
    %378 = vmatprep.subr.mxu0 0.0
    %379 = vmatpush2.msra.mxu0 0.0
    %380 = vmatprep.subr.mxu0 0.0
    %381 = vmatpush2.msra.mxu0 0.0
    %382 = vmatprep.subr.mxu0 0.0
    %383 = vmatpush2.msra.mxu0 0.0
    %384 = vmatprep.subr.mxu0 0.0
    %385 = vmatpush2.msra.mxu0 0.0
    %386 = vmatprep.subr.mxu0 0.0
    %387 = vmatpush2.msra.mxu0 0.0
    %388 = vmatprep.subr.mxu0 0.0
    %389 = vmatpush2.msra.mxu0 0.0
    %390 = vmatprep.subr.mxu0 0.0
    %391 = vmatpush2.msra.mxu0 0.0
    %392 = vmatprep.subr.mxu0 0.0
    %393 = vmatpush2.msra.mxu0 0.0
    %394 = vmatprep.subr.mxu0 0.0
    %395 = vmatpush2.msra.mxu0 0.0
    %396 = vmatprep.subr.mxu0 0.0
    %397 = vmatpush2.msra.mxu0 0.0
    %398 = vmatprep.mubr.f32.mxu0 0.0
    %399 = vmatmul.mubr.f32.gmra.mxu0 %v328
    %v400 = vpop.f32.mrf.mxu0
    %v401 = vadd.f32 %v324, %v400
    %v402 = vpop.f32.mrf.mxu0
    %403 = vdwg.mxu0
    %404 = vst.msk [vmem:[%s5] sm:$0x3] %vm221, %v401
  $region29: #{channel_gate.1} parent=0 // pred_fallthru
    _
  // Predicated region
  $region30: #{channel_gate.1} parent=0 // pred_check
    _
  $region31: #{channel_gate.1} parent=0 // pred_check_branch
    %406 = sbr.rel (0) target = $region33
  $region32: #{channel_gate.1} parent=0 // pred_region
    _
  $region33: #{channel_gate.1} parent=0 // pred_fallthru
    _
  // Predicated region
  $region34: #{channel_gate.1} parent=0 // pred_check
    _
  $region35: #{channel_gate.1} parent=0 // pred_check_branch
    %408 = sbr.rel (0) target = $region37
  $region36: #{channel_gate.1} parent=0 // pred_region
    _
  $region37: #{channel_gate.1} parent=0 // pred_fallthru
    _

</llo_original>
